<compile_context>
chip_gen: v6e
topology: v6e:2x2x1
jax: 0.10.0
libtpu: 0.0.40
codegen_flags: <defaults>
</compile_context>

<pallas_src>
import functools

import jax
import jax.numpy as jnp
from jax.experimental import pallas as pl
from jax.experimental.pallas import tpu as pltpu

LANES = 128
SUBLANES = 8
MAX_BLOCK_ROWS = 2048     # (2048, 128) f32 block = 1 MiB/buffer; fits all gens
NUM_SHARDS = 2            # leading "parallel" grid axis (uses both TCs on v7x)


def _partial_sums_kernel(x_ref, t_ref, o_ref, *, rows, block_rows,
                         steps_per_shard, needs_mask, acc_rows):
    j = pl.program_id(1)

    @pl.when(j == 0)
    def _init():
        o_ref[...] = jnp.zeros_like(o_ref)

    x = x_ref[...].astype(jnp.float32)
    t = t_ref[...].astype(jnp.float32)
    s = jax.nn.sigmoid(x)

    if needs_mask:
        # Mask rows past the logical end of the array (partial last block and
        # fully-surplus shard steps).  The index_map clamps the DMA in-bounds;
        # the *unclamped* logical block index is used here so surplus steps
        # contribute exactly zero.
        c = pl.program_id(0)
        blk = c * steps_per_shard + j
        rid = blk * block_rows + jax.lax.broadcasted_iota(
            jnp.int32, (block_rows, LANES), 0)
        valid = rid < rows
        s = jnp.where(valid, s, 0.0)
        t = jnp.where(valid, t, 0.0)

    if acc_rows == SUBLANES:
        # (block_rows, 128) -> (block_rows//8, 8, 128); sum over the leading
        # (untiled) axis is a pure cross-vreg VPU add tree — no XLU per step.
        def partial(v):
            return jnp.sum(v.reshape(-1, SUBLANES, LANES), axis=0)
    else:
        # Tiny single-block fallback when block_rows isn't a multiple of 8.
        def partial(v):
            return jnp.sum(v, axis=0, keepdims=True)

    o_ref[0, 0] += partial(s * t)   # intersection partials
    o_ref[0, 1] += partial(s)       # sum(sigmoid(x)) partials
    o_ref[0, 2] += partial(t)       # sum(target) partials


def _neg_pad_value(dtype):
    if jnp.issubdtype(dtype, jnp.floating):
        return jnp.finfo(dtype).min     # sigmoid(min_float) == 0
    return jnp.iinfo(dtype).min


def log_cosh_dice_loss(inputs, target, smooth=1.0):
    """Pallas implementation of log_cosh_diceloss.forward."""
    smooth = float(smooth)
    x_flat = jnp.reshape(inputs, (-1,))
    t_flat = jnp.reshape(target, (-1,))
    if t_flat.dtype == jnp.bool_:
        t_flat = t_flat.astype(x_flat.dtype)

    n = x_flat.shape[0]
    if n == 0:
        # Degenerate case: all sums are 0 -> dice = 1 -> x = 0 -> log(1) = 0.
        return jnp.float32(0.0)

    # Only needed when n isn't lane-aligned; pad is value-safe (sigmoid(pad)=0,
    # target pad = 0) so no extra masking is required for these elements.
    pad = (-n) % LANES
    if pad:
        x_flat = jnp.concatenate(
            [x_flat, jnp.full((pad,), _neg_pad_value(x_flat.dtype),
                              dtype=x_flat.dtype)])
        t_flat = jnp.concatenate(
            [t_flat, jnp.zeros((pad,), dtype=t_flat.dtype)])

    rows = (n + pad) // LANES
    x2d = x_flat.reshape(rows, LANES)
    t2d = t_flat.reshape(rows, LANES)

    block_rows = min(MAX_BLOCK_ROWS, rows)     # full-dim block if rows is small
    acc_rows = SUBLANES if block_rows % SUBLANES == 0 else 1
    num_blocks = pl.cdiv(rows, block_rows)
    steps_per_shard = pl.cdiv(num_blocks, NUM_SHARDS)
    needs_mask = NUM_SHARDS * steps_per_shard * block_rows > rows

    def in_map(c, j):
        # Clamp so the DMA always stays in-bounds; surplus steps are masked
        # to zero inside the kernel.
        return (jnp.minimum(c * steps_per_shard + j, num_blocks - 1), 0)

    kernel = functools.partial(
        _partial_sums_kernel, rows=rows, block_rows=block_rows,
        steps_per_shard=steps_per_shard, needs_mask=needs_mask,
        acc_rows=acc_rows)

    parts = pl.pallas_call(
        kernel,
        out_shape=jax.ShapeDtypeStruct(
            (NUM_SHARDS, 3, acc_rows, LANES), jnp.float32),
        grid_spec=pltpu.PrefetchScalarGridSpec(
            num_scalar_prefetch=0,
            grid=(NUM_SHARDS, steps_per_shard),
            in_specs=[
                pl.BlockSpec((block_rows, LANES), in_map),
                pl.BlockSpec((block_rows, LANES), in_map),
            ],
            out_specs=pl.BlockSpec(
                (1, 3, acc_rows, LANES), lambda c, j: (c, 0, 0, 0)),
        ),
        compiler_params=pltpu.CompilerParams(
            dimension_semantics=("parallel", "arbitrary")),
    )(x2d, t2d)

    # Combine per-shard vreg-shaped partials (tiny: NUM_SHARDS*3*8*128 floats)
    # and finish the scalar dice / log-cosh math in plain jnp.
    sums = jnp.sum(parts, axis=(0, 2, 3))
    inter, s_sum, t_sum = sums[0], sums[1], sums[2]
    dice = (2.0 * inter + smooth) / (s_sum + t_sum + smooth)
    xv = 1.0 - dice
    return jnp.log((jnp.exp(xv) + jnp.exp(-xv)) / 2.0)


def _reference(inputs, target, smooth=1.0):
    s = jax.nn.sigmoid(inputs.reshape(-1).astype(jnp.float32))
    t = target.reshape(-1).astype(jnp.float32)
    inter = jnp.sum(s * t)
    dice = (2.0 * inter + smooth) / (jnp.sum(s) + jnp.sum(t) + smooth)
    x = 1.0 - dice
    return jnp.log((jnp.exp(x) + jnp.exp(-x)) / 2.0)


if __name__ == "__main__":
    key = jax.random.PRNGKey(0)
    k1, k2 = jax.random.split(key)
    # NCHW-like logits and a binary mask target.
    inputs = jax.random.normal(k1, (2, 4, 16, 16), dtype=jnp.float32)
    target = (jax.random.uniform(k2, (2, 4, 16, 16)) > 0.5).astype(jnp.float32)

    loss = log_cosh_dice_loss(inputs, target, smooth=1.0)
    loss = jax.block_until_ready(loss)

    ref = _reference(inputs, target, smooth=1.0)
    assert jnp.allclose(loss, ref, atol=1e-5, rtol=1e-5), (loss, ref)
    print("KERNEL_OK")
</pallas_src>

<mosaic_0001>
module attributes {stable_mosaic.version = 11 : i64} {
  func.func @_partial_sums_kernel(%arg0: i32, %arg1: i32, %arg2: memref<16x128xf32, #tpu.memory_space<vmem>>, %arg3: memref<16x128xf32, #tpu.memory_space<vmem>>, %arg4: memref<1x3x8x128xf32, #tpu.memory_space<vmem>>) attributes {dimension_semantics = [#tpu.dimension_semantics<parallel>, #tpu.dimension_semantics<arbitrary>], iteration_bounds = array<i64: 2, 1>, scalar_prefetch = 0 : i64, scratch_operands = 0 : i64, tpu.core_type = #tpu.core_type<tc>, window_params = [{transform_indices = @transform_0, window_bounds = array<i64: 16, 128>}, {transform_indices = @transform_1, window_bounds = array<i64: 16, 128>}, {transform_indices = @transform_2, window_bounds = array<i64: 1, 3, 8, 128>}]} {
    %c0_i32 = arith.constant 0 : i32
    %0 = arith.cmpi eq, %arg1, %c0_i32 : i32
    %1 = arith.extui %0 : i1 to i32
    %c0_i32_0 = arith.constant 0 : i32
    %2 = arith.cmpi ne, %1, %c0_i32_0 : i32
    scf.if %2 {
      %cst_32 = arith.constant 0.000000e+00 : f32
      %47 = vector.broadcast %cst_32 : f32 to vector<1x3x8x128xf32>
      %c0_33 = arith.constant 0 : index
      %c0_34 = arith.constant 0 : index
      %c0_35 = arith.constant 0 : index
      %c0_36 = arith.constant 0 : index
      %48 = vector.load %arg4[%c0_33, %c0_34, %c0_35, %c0_36] : memref<1x3x8x128xf32, #tpu.memory_space<vmem>>, vector<1x3x8x128xf32>
      tpu.vector_store %arg4[%c0_33, %c0_34, %c0_35, %c0_36], %47 {strides = array<i32>} : memref<1x3x8x128xf32, #tpu.memory_space<vmem>>, vector<1x3x8x128xf32>,
    } else {
    }
    %c0 = arith.constant 0 : index
    %c0_1 = arith.constant 0 : index
    %3 = vector.load %arg2[%c0, %c0_1] : memref<16x128xf32, #tpu.memory_space<vmem>>, vector<16x128xf32>
    %c0_2 = arith.constant 0 : index
    %c0_3 = arith.constant 0 : index
    %4 = vector.load %arg3[%c0_2, %c0_3] : memref<16x128xf32, #tpu.memory_space<vmem>>, vector<16x128xf32>
    %5 = arith.negf %3 : vector<16x128xf32>
    %6 = math.exp %5 : vector<16x128xf32>
    %cst = arith.constant 1.000000e+00 : f32
    %7 = vector.broadcast %cst : f32 to vector<16x128xf32>
    %8 = arith.addf %7, %6 : vector<16x128xf32>
    %9 = arith.divf %7, %8 : vector<16x128xf32>
    %c1_i32 = arith.constant 1 : i32
    %10 = arith.muli %arg0, %c1_i32 : i32
    %11 = arith.addi %10, %arg1 : i32
    %c16_i32 = arith.constant 16 : i32
    %12 = arith.muli %11, %c16_i32 : i32
    %13 = tpu.iota {dimensions = array<i32: 0>} : vector<16x128xi32>
    %14 = vector.broadcast %12 : i32 to vector<16x128xi32>
    %15 = arith.addi %14, %13 : vector<16x128xi32>
    %c16_i32_4 = arith.constant 16 : i32
    %16 = vector.broadcast %c16_i32_4 : i32 to vector<16x128xi32>
    %17 = arith.cmpi slt, %15, %16 : vector<16x128xi32>
    %cst_5 = arith.constant 0.000000e+00 : f32
    %18 = vector.broadcast %cst_5 : f32 to vector<16x128xf32>
    %19 = arith.select %17, %9, %18 : vector<16x128xi1>, vector<16x128xf32>
    %cst_6 = arith.constant 0.000000e+00 : f32
    %20 = vector.broadcast %cst_6 : f32 to vector<16x128xf32>
    %21 = arith.select %17, %4, %20 : vector<16x128xi1>, vector<16x128xf32>
    %c0_7 = arith.constant 0 : index
    %c0_8 = arith.constant 0 : index
    %c0_9 = arith.constant 0 : index
    %c0_10 = arith.constant 0 : index
    %22 = vector.load %arg4[%c0_7, %c0_8, %c0_9, %c0_10] : memref<1x3x8x128xf32, #tpu.memory_space<vmem>>, vector<1x1x8x128xf32>
    %23 = vector.shape_cast %22 : vector<1x1x8x128xf32> to vector<8x128xf32>
    %24 = arith.mulf %19, %21 : vector<16x128xf32>
    %25 = vector.shape_cast %24 : vector<16x128xf32> to vector<2x8x128xf32>
    %cst_11 = arith.constant dense<0.000000e+00> : vector<8x128xf32>
    %26 = vector.multi_reduction <add>, %25, %cst_11 [0] : vector<2x8x128xf32> to vector<8x128xf32>
    %27 = arith.addf %23, %26 : vector<8x128xf32>
    %c0_12 = arith.constant 0 : index
    %c0_13 = arith.constant 0 : index
    %c0_14 = arith.constant 0 : index
    %c0_15 = arith.constant 0 : index
    %28 = vector.load %arg4[%c0_12, %c0_13, %c0_14, %c0_15] : memref<1x3x8x128xf32, #tpu.memory_space<vmem>>, vector<1x1x8x128xf32>
    %29 = vector.shape_cast %28 : vector<1x1x8x128xf32> to vector<8x128xf32>
    %30 = vector.shape_cast %27 : vector<8x128xf32> to vector<1x1x8x128xf32>
    tpu.vector_store %arg4[%c0_12, %c0_13, %c0_14, %c0_15], %30 {strides = array<i32>} : memref<1x3x8x128xf32, #tpu.memory_space<vmem>>, vector<1x1x8x128xf32>,
    %c0_16 = arith.constant 0 : index
    %c1 = arith.constant 1 : index
    %c0_17 = arith.constant 0 : index
    %c0_18 = arith.constant 0 : index
    %31 = vector.load %arg4[%c0_16, %c1, %c0_17, %c0_18] : memref<1x3x8x128xf32, #tpu.memory_space<vmem>>, vector<1x1x8x128xf32>
    %32 = vector.shape_cast %31 : vector<1x1x8x128xf32> to vector<8x128xf32>
    %33 = vector.shape_cast %19 : vector<16x128xf32> to vector<2x8x128xf32>
    %cst_19 = arith.constant dense<0.000000e+00> : vector<8x128xf32>
    %34 = vector.multi_reduction <add>, %33, %cst_19 [0] : vector<2x8x128xf32> to vector<8x128xf32>
    %35 = arith.addf %32, %34 : vector<8x128xf32>
    %c0_20 = arith.constant 0 : index
    %c1_21 = arith.constant 1 : index
    %c0_22 = arith.constant 0 : index
    %c0_23 = arith.constant 0 : index
    %36 = vector.load %arg4[%c0_20, %c1_21, %c0_22, %c0_23] : memref<1x3x8x128xf32, #tpu.memory_space<vmem>>, vector<1x1x8x128xf32>
    %37 = vector.shape_cast %36 : vector<1x1x8x128xf32> to vector<8x128xf32>
    %38 = vector.shape_cast %35 : vector<8x128xf32> to vector<1x1x8x128xf32>
    tpu.vector_store %arg4[%c0_20, %c1_21, %c0_22, %c0_23], %38 {strides = array<i32>} : memref<1x3x8x128xf32, #tpu.memory_space<vmem>>, vector<1x1x8x128xf32>,
    %c0_24 = arith.constant 0 : index
    %c2 = arith.constant 2 : index
    %c0_25 = arith.constant 0 : index
    %c0_26 = arith.constant 0 : index
    %39 = vector.load %arg4[%c0_24, %c2, %c0_25, %c0_26] : memref<1x3x8x128xf32, #tpu.memory_space<vmem>>, vector<1x1x8x128xf32>
    %40 = vector.shape_cast %39 : vector<1x1x8x128xf32> to vector<8x128xf32>
    %41 = vector.shape_cast %21 : vector<16x128xf32> to vector<2x8x128xf32>
    %cst_27 = arith.constant dense<0.000000e+00> : vector<8x128xf32>
    %42 = vector.multi_reduction <add>, %41, %cst_27 [0] : vector<2x8x128xf32> to vector<8x128xf32>
    %43 = arith.addf %40, %42 : vector<8x128xf32>
    %c0_28 = arith.constant 0 : index
    %c2_29 = arith.constant 2 : index
    %c0_30 = arith.constant 0 : index
    %c0_31 = arith.constant 0 : index
    %44 = vector.load %arg4[%c0_28, %c2_29, %c0_30, %c0_31] : memref<1x3x8x128xf32, #tpu.memory_space<vmem>>, vector<1x1x8x128xf32>
    %45 = vector.shape_cast %44 : vector<1x1x8x128xf32> to vector<8x128xf32>
    %46 = vector.shape_cast %43 : vector<8x128xf32> to vector<1x1x8x128xf32>
    tpu.vector_store %arg4[%c0_28, %c2_29, %c0_30, %c0_31], %46 {strides = array<i32>} : memref<1x3x8x128xf32, #tpu.memory_space<vmem>>, vector<1x1x8x128xf32>,
    return
  }
  func.func @transform_0(%arg0: i32, %arg1: i32) -> (i32, i32) {
    %c1_i32 = arith.constant 1 : i32
    %0 = arith.muli %arg0, %c1_i32 : i32
    %1 = arith.addi %0, %arg1 : i32
    %c0_i32 = arith.constant 0 : i32
    %2 = arith.minsi %1, %c0_i32 : i32
    %c0_i32_0 = arith.constant 0 : i32
    %c0_i32_1 = arith.constant 0 : i32
    return %2, %c0_i32_0 : i32, i32
  }
  func.func @transform_1(%arg0: i32, %arg1: i32) -> (i32, i32) {
    %c1_i32 = arith.constant 1 : i32
    %0 = arith.muli %arg0, %c1_i32 : i32
    %1 = arith.addi %0, %arg1 : i32
    %c0_i32 = arith.constant 0 : i32
    %2 = arith.minsi %1, %c0_i32 : i32
    %c0_i32_0 = arith.constant 0 : i32
    %c0_i32_1 = arith.constant 0 : i32
    return %2, %c0_i32_0 : i32, i32
  }
  func.func @transform_2(%arg0: i32, %arg1: i32) -> (i32, i32, i32, i32) {
    %c0_i32 = arith.constant 0 : i32
    %c0_i32_0 = arith.constant 0 : i32
    %c0_i32_1 = arith.constant 0 : i32
    %c0_i32_2 = arith.constant 0 : i32
    return %arg0, %c0_i32, %c0_i32_0, %c0_i32_1 : i32, i32, i32, i32
  }
}

</mosaic_0001>

<llo_original>
// kernel: tpu_custom_call.1
$region0: #{tpu_custom_call.1}
  #allocation0 [shape = 'u32[]', space=smem, size = 0x4, offset = 0x4, fixed_abs, tag = 'smem constant byte address 0x4 - core index']
  #allocation1 [shape = 'u32[144,128]{1,0:T(1,128)}', space=vmem, size = 0x12000, scoped, tag = 'internal scratch']
  %s0 = inlined_call_operand.hbm [shape: f32[16,128], index: 0, kind: input, shape index: {}]
  %s1 = inlined_call_operand.hbm [shape: f32[16,128], index: 1, kind: input, shape index: {}]
  %s2 = inlined_call_operand.hbm [shape: f32[2,3,8,128], index: 2, kind: output, shape index: {}]
  %s3 = sld [smem:[#allocation0]]
  $region53: #{tpu_custom_call.1} parent=0
    _
  %s5 = ssub.s32 1, %s3
  %s6 = scalar_select 0, %s5, %s3
  $region1: #{tpu_custom_call.1} parent=0
    #allocation2 [shape = 'u8[16384]{0}', space=vmem, size = 0x4000, scoped, tag = 'input window, operand 0']
    #allocation3 [shape = 's32[2]{0}', space=sflag, size = 0x8, scoped, tag = 'scoped memory for tpu_custom_call.1']
    #allocation4 [shape = 's32[2]{0}', space=sflag, size = 0x8, scoped, tag = 'scoped memory for tpu_custom_call.1']
    #allocation5 [shape = 'u8[16384]{0}', space=vmem, size = 0x4000, scoped, tag = 'input window, operand 1']
    #allocation6 [shape = 's32[2]{0}', space=sflag, size = 0x8, scoped, tag = 'scoped memory for tpu_custom_call.1']
    #allocation7 [shape = 'u8[24576]{0}', space=vmem, size = 0x6000, scoped, tag = 'output window, operand 0']
    %7 = vsyncpa [#allocation3], 0
    %s8 = scalar_lea.sflag [#allocation3], 1
    %9 = vsyncpa %s8, 0
    %10 = vsyncpa [#allocation6], 0
    %s11 = scalar_lea.sflag [#allocation6], 1
    %12 = vsyncpa %s11, 0
    %13 = vsyncpa [#allocation4], 0
    %s14 = scalar_lea.sflag [#allocation4], 1
    %15 = vsyncpa %s14, 0
    loop: start=0, step=1, limit=4
    $region2: #{tpu_custom_call.1} parent=1 // loop_pre_header
      _
    $region3: #{tpu_custom_call.1} parent=1 // loop_header
      %s17 = sphi 0, %s21
      %p18 = scmp.ge.s32.totalorder %s17, 4
      %s24 = sphi 0, %s36
      %s25 = sphi 0, %s32
      %s26 = sphi 0, %s24
      %s27 = sphi 0, %s25
      %s28 = sphi 0, %s26
      %s29 = sphi 0, %s27
      %s45 = sphi 0, %s47
      %s48 = sphi 0, %s45
      %s49 = sphi 0, %s48
      %s65 = sphi 0, %s49
      %s77 = sphi 0, %s79
      %s80 = sphi 0, %s77
      %s81 = sphi 0, %s80
      %s97 = sphi 0, %s81
      %s103 = sphi 0, %s105
      %s106 = sphi 0, %s103
      %s107 = sphi 0, %s106
      %s123 = sphi 0, %s107
    $region4: #{tpu_custom_call.1} parent=1 // loop_header_branch
      %20 = sbr.rel (%p18) target = $region8
    $region5: #{tpu_custom_call.1} parent=1 // loop_body
      %s22 = ssub.s32 %s17, 1
      %s23 = ssub.s32 %s17, 2
      %s30 = sadd.s32 1, %s25
      %p31 = scmp.ge.s32.totalorder %s30, 1
      %s32 = scalar_select %p31, 0, %s30
      %s33 = sadd.s32 1, %s24
      %s34 = scalar_select %p31, %s33, %s24
      %p35 = scmp.ge.s32.totalorder %s34, 2
      %s36 = scalar_select %p35, 0, %s34
      %s37 = sadd.s32 %s24, %s25
      %p38 = scmp.lt.s32.totalorder %s37, 0
      %s39 = scalar_select %p38, %s37, 0
      %s40 = sadd.s32 %s36, %s32
      %p41 = scmp.lt.s32.totalorder %s40, 0
      %s42 = scalar_select %p41, %s40, 0
      %s43 = ssub.s32 %s39, %s42
      %p44 = scmp.eq.s32.totalorder %s43, 0
      %s46 = sadd.s32 %s45, 1
      %s47 = scalar_select %p44, %s45, %s46
      %p50 = pneg %p44
      %p51 = scmp.eq.s32.totalorder %s17, 1
      %p52 = por %p50, %p51
      %p53 = scmp.ne.s32.totalorder %s45, %s48
      %p54 = scmp.eq.s32.totalorder %s17, 0
      %p55 = por %p53, %p54
      %p56 = scmp.ne.s32.totalorder %s45, %s48
      %p57 = scmp.eq.s32.totalorder %s22, 1
      %p58 = por %p56, %p57
      %p59 = scmp.ne.s32.totalorder %s48, %s49
      %p60 = scmp.eq.s32.totalorder %s22, 0
      %p61 = por %p59, %p60
      %p62 = scmp.ne.s32.totalorder %s48, %s49
      %p63 = scmp.eq.s32.totalorder %s23, 1
      %p64 = por %p62, %p63
      %p66 = scmp.ne.s32.totalorder %s49, %s65
      %p67 = scmp.eq.s32.totalorder %s23, 0
      %p68 = por %p66, %p67
      %s69 = sadd.s32 %s24, %s25
      %p70 = scmp.lt.s32.totalorder %s69, 0
      %s71 = scalar_select %p70, %s69, 0
      %s72 = sadd.s32 %s36, %s32
      %p73 = scmp.lt.s32.totalorder %s72, 0
      %s74 = scalar_select %p73, %s72, 0
      %s75 = ssub.s32 %s71, %s74
      %p76 = scmp.eq.s32.totalorder %s75, 0
      %s78 = sadd.s32 %s77, 1
      %s79 = scalar_select %p76, %s77, %s78
      %p82 = pneg %p76
      %p83 = scmp.eq.s32.totalorder %s17, 1
      %p84 = por %p82, %p83
      %p85 = scmp.ne.s32.totalorder %s77, %s80
      %p86 = scmp.eq.s32.totalorder %s17, 0
      %p87 = por %p85, %p86
      %p88 = scmp.ne.s32.totalorder %s77, %s80
      %p89 = scmp.eq.s32.totalorder %s22, 1
      %p90 = por %p88, %p89
      %p91 = scmp.ne.s32.totalorder %s80, %s81
      %p92 = scmp.eq.s32.totalorder %s22, 0
      %p93 = por %p91, %p92
      %p94 = scmp.ne.s32.totalorder %s80, %s81
      %p95 = scmp.eq.s32.totalorder %s23, 1
      %p96 = por %p94, %p95
      %p98 = scmp.ne.s32.totalorder %s81, %s97
      %p99 = scmp.eq.s32.totalorder %s23, 0
      %p100 = por %p98, %p99
      %s101 = ssub.s32 %s24, %s36
      %p102 = scmp.eq.s32.totalorder %s101, 0
      %s104 = sadd.s32 %s103, 1
      %s105 = scalar_select %p102, %s103, %s104
      %p108 = pneg %p102
      %p109 = scmp.eq.s32.totalorder %s17, 1
      %p110 = por %p108, %p109
      %p111 = scmp.ne.s32.totalorder %s103, %s106
      %p112 = scmp.eq.s32.totalorder %s17, 0
      %p113 = por %p111, %p112
      %p114 = scmp.ne.s32.totalorder %s103, %s106
      %p115 = scmp.eq.s32.totalorder %s22, 1
      %p116 = por %p114, %p115
      %p117 = scmp.ne.s32.totalorder %s106, %s107
      %p118 = scmp.eq.s32.totalorder %s22, 0
      %p119 = por %p117, %p118
      %p120 = scmp.ne.s32.totalorder %s106, %s107
      %p121 = scmp.eq.s32.totalorder %s23, 1
      %p122 = por %p120, %p121
      %p124 = scmp.ne.s32.totalorder %s107, %s123
      %p125 = scmp.eq.s32.totalorder %s23, 0
      %p126 = por %p124, %p125
      %p127 = scmp.le.s32.totalorder 1, %s17
      %p128 = scmp.lt.s32.totalorder %s17, 3
      %p129 = pnand %p127, %p128
      %p130 = pneg %p129
      // Predicated region
      $region9: #{tpu_custom_call.1} parent=5 // pred_check
        _
      $region10: #{tpu_custom_call.1} parent=5 // pred_check_branch
        %132 = sbr.rel (%p129) target = $region12
      $region11: #{tpu_custom_call.1} parent=5 // pred_region
        %s133 = ssub.s32 %s17, 1
      $region12: #{tpu_custom_call.1} parent=5 // pred_fallthru
        _
      %p134 = scmp.lt.s32.totalorder %s17, 2
      // Predicated region
      $region13: #{tpu_custom_call.1} parent=5 // pred_check
        %p135 = pneg %p134
      $region14: #{tpu_custom_call.1} parent=5 // pred_check_branch
        %137 = sbr.rel (%p135) target = $region16
      $region15: #{tpu_custom_call.1} parent=5 // pred_region
        // Predicated region
        $region17: #{tpu_custom_call.1} parent=15 // pred_check
          %p138 = pneg %p55
        $region18: #{tpu_custom_call.1} parent=15 // pred_check_branch
          %140 = sbr.rel (%p138) target = $region20
        $region19: #{tpu_custom_call.1} parent=15 // pred_region
          %s141 = sand.u32 %s45, 1
          %s142 = scalar_lea.sflag [#allocation3], %s141
          %s143 = sand.u32 %s45, 1
          %s144 = smul.addr %s143, 16
          %s145 = scalar_lea.vmem [#allocation2], %s144
          %s146 = sadd.s32 %s24, %s25
          %p147 = scmp.lt.s32.totalorder %s146, 0
          %s148 = scalar_select %p147, %s146, 0
          %s149 = smul.u32 2, %s148
          %s151 = ssub.s32 256, 256
          %152 = vsyncadd %s142, %s151
          %s153 = smul.addr %s149, 128
          %s154 = scalar_lea.hbm %s0, %s153
          %s155 = sshll.u32 %s145, 4
          %s156 = int_to_ptr.vmem [resolvable:$true] %s155
          %161 = dma.hbm_to_vmem [thread:$0]  %s154, 256, %s156, %s142, 128, 128, 8
        $region20: #{tpu_custom_call.1} parent=15 // pred_fallthru
          _
        // Predicated region
        $region21: #{tpu_custom_call.1} parent=15 // pred_check
          %p162 = pneg %p87
        $region22: #{tpu_custom_call.1} parent=15 // pred_check_branch
          %164 = sbr.rel (%p162) target = $region24
        $region23: #{tpu_custom_call.1} parent=15 // pred_region
          %s165 = sand.u32 %s77, 1
          %s166 = scalar_lea.sflag [#allocation6], %s165
          %s167 = sand.u32 %s77, 1
          %s168 = smul.addr %s167, 16
          %s169 = scalar_lea.vmem [#allocation5], %s168
          %s170 = sadd.s32 %s24, %s25
          %p171 = scmp.lt.s32.totalorder %s170, 0
          %s172 = scalar_select %p171, %s170, 0
          %s173 = smul.u32 2, %s172
          %s175 = ssub.s32 256, 256
          %176 = vsyncadd %s166, %s175
          %s177 = smul.addr %s173, 128
          %s178 = scalar_lea.hbm %s1, %s177
          %s179 = sshll.u32 %s169, 4
          %s180 = int_to_ptr.vmem [resolvable:$true] %s179
          %185 = dma.hbm_to_vmem [thread:$0]  %s178, 256, %s180, %s166, 128, 128, 8
        $region24: #{tpu_custom_call.1} parent=15 // pred_fallthru
          _
      $region16: #{tpu_custom_call.1} parent=5 // pred_fallthru
        _
      %p186 = scmp.le.s32.totalorder 1, %s17
      %p187 = scmp.lt.s32.totalorder %s17, 3
      %p188 = pnand %p186, %p187
      %p189 = pneg %p188
      // Predicated region
      $region25: #{tpu_custom_call.1} parent=5 // pred_check
        _
      $region26: #{tpu_custom_call.1} parent=5 // pred_check_branch
        %191 = sbr.rel (%p188) target = $region28
      $region27: #{tpu_custom_call.1} parent=5 // pred_region
        %s192 = ssub.s32 %s17, 1
        %s193 = sand.u32 %s48, 1
        %s194 = scalar_lea.sflag [#allocation3], %s193
        %s195 = sand.u32 %s48, 1
        %s196 = smul.addr %s195, 16
        %s197 = scalar_lea.vmem [#allocation2], %s196
        // Predicated region
        $region29: #{tpu_custom_call.1} parent=27 // pred_check
          %p198 = pneg %p61
        $region30: #{tpu_custom_call.1} parent=27 // pred_check_branch
          %200 = sbr.rel (%p198) target = $region32
        $region31: #{tpu_custom_call.1} parent=27 // pred_region
          %201 = dma.done %s194, 256
        $region32: #{tpu_custom_call.1} parent=27 // pred_fallthru
          _
        %s202 = sand.u32 %s80, 1
        %s203 = scalar_lea.sflag [#allocation6], %s202
        %s204 = sand.u32 %s80, 1
        %s205 = smul.addr %s204, 16
        %s206 = scalar_lea.vmem [#allocation5], %s205
        // Predicated region
        $region33: #{tpu_custom_call.1} parent=27 // pred_check
          %p207 = pneg %p93
        $region34: #{tpu_custom_call.1} parent=27 // pred_check_branch
          %209 = sbr.rel (%p207) target = $region36
        $region35: #{tpu_custom_call.1} parent=27 // pred_region
          %210 = dma.done %s203, 256
        $region36: #{tpu_custom_call.1} parent=27 // pred_fallthru
          _
        %s211 = sand.u32 %s48, 1
        %s212 = scalar_lea.sflag [#allocation3], %s211
        %s213 = sand.u32 %s48, 1
        %s214 = smul.addr %s213, 16
        %s215 = scalar_lea.vmem [#allocation2], %s214
        %p216 = pneg %p61
        %p217 = pneg %p58
        %s218 = sand.u32 %s80, 1
        %s219 = scalar_lea.sflag [#allocation6], %s218
        %s220 = sand.u32 %s80, 1
        %s221 = smul.addr %s220, 16
        %s222 = scalar_lea.vmem [#allocation5], %s221
        %p223 = pneg %p93
        %p224 = pneg %p90
        %p225 = pneg %p119
        %p226 = pneg %p116
        %s227 = sand.u32 %s106, 1
        %s228 = scalar_lea.sflag [#allocation4], %s227
        %s229 = sand.u32 %s106, 1
        %s230 = smul.addr %s229, 24
        %s231 = scalar_lea.vmem [#allocation7], %s230
        %s232 = sadd.s32 %s26, %s27
        %p233 = scmp.lt.s32.totalorder %s232, 0
        %s234 = scalar_select %p233, %s232, 0
        %s235 = smul.u32 2, %s234
        %s236 = sadd.s32 %s26, %s27
        %p237 = scmp.lt.s32.totalorder %s236, 0
        %s238 = scalar_select %p237, %s236, 0
        %s239 = smul.u32 2, %s238
        %p240 = scmp.eq.s32.totalorder %s27, 0
        // Predicated region
        $region37: #{tpu_custom_call.1} parent=27 // pred_check
          %p241 = pneg %p240
        $region38: #{tpu_custom_call.1} parent=27 // pred_check_branch
          %243 = sbr.rel (%p241) target = $region40
        $region39: #{tpu_custom_call.1} parent=27 // pred_region
          %244 = vst [vmem:[%s231] sm:$0xff] 0.0
          %245 = vst [vmem:[%s231 + $0x8] sm:$0xff] 0.0
          %246 = vst [vmem:[%s231 + $0x10] sm:$0xff] 0.0
        $region40: #{tpu_custom_call.1} parent=27 // pred_fallthru
          _
        %v247 = vld [vmem:[%s197] sm:$0xff]
        %v248 = vld [vmem:[%s197 + $0x8] sm:$0xff]
        %v249 = vld [vmem:[%s206] sm:$0xff]
        %v250 = vld [vmem:[%s206 + $0x8] sm:$0xff]
        %v251 = vxor.u32 %v247, 2147483648
        %v252 = vxor.u32 %v248, 2147483648
        %v253 = vmul.f32 %v251, 1.442695
        %v254 = vpow.pop %v253
        %v255 = vmul.f32 %v252, 1.442695
        %v256 = vpow.pop %v255
        %v257 = vadd.f32 %v254, 1.0
        %v258 = vadd.f32 %v256, 1.0
        %v259 = vrcp.pop %v257
        %v260 = vmul.f32 1.0, %v259
        %v261 = vrcp.pop %v258
        %v262 = vmul.f32 1.0, %v261
        %s263 = sadd.s32 %s26, %s27
        %s264 = smul.u32 %s263, 16
        %v265 = vlaneseq
        %v266 = vshrl.u32 %v265, 7
        %v267 = vadd.s32 %v266, 8
        %v268 = vstv %s264
        %v269 = vadd.s32 %v268, %v266
        %v270 = vadd.s32 %v268, %v267
        %vm271 = vcmp.lt.s32.totalorder %v269, 16
        %vm272 = vcmp.lt.s32.totalorder %v270, 16
        %v273 = vsel %vm271, %v260, 0.0
        %v274 = vsel %vm272, %v262, 0.0
        %v275 = vsel %vm271, %v249, 0.0
        %v276 = vsel %vm272, %v250, 0.0
        %v277 = vld [vmem:[%s231] sm:$0xff]
        %v278 = vmul.f32 %v273, %v275
        %v279 = vmul.f32 %v274, %v276
        %v280 = vadd.f32 %v278, %v279
        %v281 = vadd.f32 %v277, %v280
        %282 = vst [vmem:[%s231] sm:$0xff] %v281
        %s283 = scalar_lea.vmem %s231, 8 [#allocation7]
        %v284 = vld [vmem:[%s283] sm:$0xff]
        %v285 = vadd.f32 %v273, %v274
        %v286 = vadd.f32 %v284, %v285
        %287 = vst [vmem:[%s283] sm:$0xff] %v286
        %s288 = scalar_lea.vmem %s231, 16 [#allocation7]
        %v289 = vld [vmem:[%s288] sm:$0xff]
        %v290 = vadd.f32 %v275, %v276
        %v291 = vadd.f32 %v289, %v290
        %292 = vst [vmem:[%s288] sm:$0xff] %v291
        %s293 = sand.u32 %s106, 1
        %s294 = scalar_lea.sflag [#allocation4], %s293
        %s295 = sand.u32 %s106, 1
        %s296 = smul.addr %s295, 24
        %s297 = scalar_lea.vmem [#allocation7], %s296
        // Predicated region
        $region41: #{tpu_custom_call.1} parent=27 // pred_check
          %p298 = pneg %p116
        $region42: #{tpu_custom_call.1} parent=27 // pred_check_branch
          %300 = sbr.rel (%p298) target = $region44
        $region43: #{tpu_custom_call.1} parent=27 // pred_region
          %s302 = ssub.s32 384, 384
          %303 = vsyncadd %s294, %s302
          %s304 = smul.addr %s26, 3
          %s305 = smul.addr %s304, 128
          %s306 = scalar_lea.hbm %s2, %s305
          %s307 = sshll.u32 %s297, 4
          %s308 = int_to_ptr.vmem [resolvable:$true] %s307
          %313 = dma.vmem_to_hbm [thread:$0]  %s308, 384, %s306, %s294, 128, 128, 8
        $region44: #{tpu_custom_call.1} parent=27 // pred_fallthru
          _
      $region28: #{tpu_custom_call.1} parent=5 // pred_fallthru
        _
      %p314 = scmp.le.s32.totalorder 2, %s17
      // Predicated region
      $region45: #{tpu_custom_call.1} parent=5 // pred_check
        %p315 = pneg %p314
      $region46: #{tpu_custom_call.1} parent=5 // pred_check_branch
        %317 = sbr.rel (%p315) target = $region48
      $region47: #{tpu_custom_call.1} parent=5 // pred_region
        %s318 = ssub.s32 %s17, 2
        // Predicated region
        $region49: #{tpu_custom_call.1} parent=47 // pred_check
          %p319 = pneg %p122
        $region50: #{tpu_custom_call.1} parent=47 // pred_check_branch
          %321 = sbr.rel (%p319) target = $region52
        $region51: #{tpu_custom_call.1} parent=47 // pred_region
          %s322 = sand.u32 %s107, 1
          %s323 = scalar_lea.sflag [#allocation4], %s322
          %s324 = sand.u32 %s107, 1
          %s325 = smul.addr %s324, 24
          %s326 = scalar_lea.vmem [#allocation7], %s325
          %327 = dma.done %s323, 384
        $region52: #{tpu_custom_call.1} parent=47 // pred_fallthru
          _
      $region48: #{tpu_custom_call.1} parent=5 // pred_fallthru
        _
    $region6: #{tpu_custom_call.1} parent=1 // loop_footer
      %s21 = sadd.s32 1, %s17
    $region7: #{tpu_custom_call.1} parent=1 // loop_footer_branch
      %16 = sbr.rel target = $region3
    $region8: #{tpu_custom_call.1} parent=1 // loop_exit
      _
    %328 = vsyncpa [#allocation3], 1
    %s329 = scalar_lea.sflag [#allocation3], 1
    %330 = vsyncpa %s329, 1
    %331 = vsyncpa [#allocation6], 1
    %s332 = scalar_lea.sflag [#allocation6], 1
    %333 = vsyncpa %s332, 1
    %334 = vsyncpa [#allocation4], 1
    %s335 = scalar_lea.sflag [#allocation4], 1
    %336 = vsyncpa %s335, 1

</llo_original>
